<compile_context>
chip_gen: v6e
topology: v6e:2x2x1
jax: 0.10.0
libtpu: 0.0.40
codegen_flags: <defaults>
</compile_context>

<pallas_src>
import functools

import jax
import jax.numpy as jnp
from jax.experimental import pallas as pl
from jax.experimental.pallas import tpu as pltpu


def _round_up(v, m):
    return ((v + m - 1) // m) * m


def _aggregation_kernel(n_ref, x_ref, waug_ref, b1_ref, w2_ref, b2_ref,
                        out_ref, acc_ref, *, fp, ap):
    """Grid = (2 core-slots, blocks-per-slot); reduces over the N axis.

    x_ref   : (TN, F)      native-layout tile of x
    waug_ref: (fp+ap, F)   [I_F ; 0 ; W1 ; 0]
    b1_ref  : (ap, 1)      b1 as a column, zero-padded
    w2_ref  : (ap, 1)      w2 as a column, zero-padded
    b2_ref  : (1, 1)
    out_ref : (1, fp, 1)   per-core-slot partial mean
    acc_ref : (fp, 1)      f32 accumulator scratch
    """
    c = pl.program_id(0)              # core slot (parallel axis)
    i = pl.program_id(1)              # block within this slot (reduction axis)
    bpc = pl.num_programs(1)
    tn = x_ref.shape[0]

    @pl.when(i == 0)
    def _init():
        acc_ref[...] = jnp.zeros_like(acc_ref)

    x = x_ref[...].astype(jnp.float32)                   # (TN, F)

    # One transposed-RHS MXU pass gives both lane-dense x^T and W1.x^T.
    aug = jax.lax.dot_general(
        waug_ref[...], x,
        dimension_numbers=(((1,), (1,)), ((), ())),      # contract the F axes
        preferred_element_type=jnp.float32)              # (fp+ap, TN)

    x_t = aug[:fp, :]                                    # (fp, TN)  == x^T
    h_t = jnp.tanh(aug[fp:fp + ap, :] + b1_ref[...])     # (ap, TN)

    # gate = w2 . h + b2  (VPU multiply + sublane reduce; lane-dense).
    # TODO(synk): on v7x this reduction could also ride the idle MXU.
    gate = jnp.sum(h_t * w2_ref[...], axis=0, keepdims=True) + b2_ref[...]

    # Mask the ragged tail / overhanging (clamped) blocks.  Zero BOTH operands
    # so unspecified out-of-bounds data (even NaN/Inf) cannot reach the sum.
    start = (c * bpc + i) * tn
    rows = jax.lax.broadcasted_iota(jnp.int32, (1, tn), 1) + start
    valid = rows < n_ref[0]
    gate = jnp.where(valid, gate, 0.0)
    x_t = jnp.where(valid, x_t, 0.0)

    # Partial sum over this tile's rows of  x * gate.
    acc_ref[...] += jnp.sum(x_t * gate, axis=1, keepdims=True)   # (fp, 1)

    @pl.when(i == bpc - 1)
    def _finalize():
        inv_n = 1.0 / n_ref[0].astype(jnp.float32)
        out_ref[0] = (acc_ref[...] * inv_n).astype(out_ref.dtype)


def aggregation_forward(x, w1, b1, w2, b2, *, block_rows=16384):
    """mean(x * gate(x), dim=0) with gate = Linear -> Tanh -> Linear(width 1).

    x : (N, F); w1: (A, F); b1: (A,); w2: (1, A); b2: (1,).  Returns (F,).
    """
    # TODO(synk): only the default aggregation (mean over dim=0) is
    # implemented; custom `aggregation_func` / non-default `dim` are not.
    n, f = x.shape
    a = w1.shape[0]
    fp = _round_up(f, 8)             # padded sublane size of the x^T block
    ap = _round_up(a, 8)             # padded sublane size of the hidden block

    # Row tile: multiple of 8, capped so the double-buffered input plus
    # intermediates stay well inside the v7x 64 MiB per-core VMEM.
    block_rows = max(8, _round_up(block_rows, 8))
    tn = min(_round_up(max(n, 1), 8), block_rows)
    n_blocks = pl.cdiv(n, tn)
    bpc = pl.cdiv(n_blocks, 2)       # blocks per core slot (2-way N split)
    last_block = n_blocks - 1

    f32 = jnp.float32
    x_in = x if jnp.issubdtype(x.dtype, jnp.floating) else x.astype(f32)

    # Augmented weights: rows [0:f) = I_F, rows [fp:fp+a) = W1, rest zeros.
    w_aug = jnp.zeros((fp + ap, f), f32)
    w_aug = w_aug.at[:f, :].set(jnp.eye(f, dtype=f32))
    w_aug = w_aug.at[fp:fp + a, :].set(w1.astype(f32))
    b1p = jnp.zeros((ap, 1), f32).at[:a, 0].set(b1.astype(f32).reshape(a))
    w2p = jnp.zeros((ap, 1), f32).at[:a, 0].set(w2.astype(f32).reshape(a))
    b2p = b2.astype(f32).reshape(1, 1)
    n_smem = jnp.array([n], dtype=jnp.int32)

    def x_map(c, i, n_s):
        blk = c * bpc + i
        return (jnp.minimum(blk, last_block), 0)   # clamp overhanging slots

    kernel = functools.partial(_aggregation_kernel, fp=fp, ap=ap)

    partials = pl.pallas_call(
        kernel,
        out_shape=jax.ShapeDtypeStruct((2, fp, 1), f32),
        grid_spec=pltpu.PrefetchScalarGridSpec(
            num_scalar_prefetch=1,
            grid=(2, bpc),
            in_specs=[
                pl.BlockSpec((tn, f), x_map),                         # x tile
                pl.BlockSpec((fp + ap, f), lambda c, i, n_s: (0, 0)),  # W_aug
                pl.BlockSpec((ap, 1), lambda c, i, n_s: (0, 0)),       # b1
                pl.BlockSpec((ap, 1), lambda c, i, n_s: (0, 0)),       # w2
                pl.BlockSpec((1, 1), lambda c, i, n_s: (0, 0)),        # b2
            ],
            out_specs=pl.BlockSpec((1, fp, 1), lambda c, i, n_s: (c, 0, 0)),
            scratch_shapes=[pltpu.VMEM((fp, 1), f32)],
        ),
        compiler_params=pltpu.CompilerParams(
            dimension_semantics=("parallel", "arbitrary"),
            vmem_limit_bytes=40 << 20,
        ),
    )(n_smem, x_in, w_aug, b1p, w2p, b2p)

    # Combine the two per-slot partial means (each already scaled by 1/N).
    return jnp.sum(partials, axis=0)[:f, 0]


def reference_forward(x, w1, b1, w2, b2):
    h = jnp.tanh(x @ w1.T + b1)
    gate = h @ w2.T + b2
    return jnp.mean(x * gate, axis=0)


if __name__ == "__main__":
    linear_nodes = 15      # F (input feature dim)
    attention_nodes = 15   # A (hidden dim of the attention MLP)

    key = jax.random.PRNGKey(0)
    k1, k2, k3, k4, kx1, kx2 = jax.random.split(key, 6)

    # Parameters match nn.Linear(15, 15) / nn.Linear(15, 1) shapes.
    w1 = jax.random.normal(k1, (attention_nodes, linear_nodes), jnp.float32) * 0.1
    b1 = jax.random.normal(k2, (attention_nodes,), jnp.float32) * 0.1
    w2 = jax.random.normal(k3, (1, attention_nodes), jnp.float32) * 0.1
    b2 = jax.random.normal(k4, (1,), jnp.float32) * 0.1

    # Case 1: small bag, single block per core slot.
    x_a = jax.random.normal(kx1, (1000, linear_nodes), jnp.float32)
    out_a = jax.block_until_ready(aggregation_forward(x_a, w1, b1, w2, b2))
    ref_a = reference_forward(x_a, w1, b1, w2, b2)

    # Case 2: multi-block reduction, ragged tail mask, and the clamped
    # (fully masked) duplicate block on the second core slot.
    x_b = jax.random.normal(kx2, (173, linear_nodes), jnp.float32)
    out_b = jax.block_until_ready(
        aggregation_forward(x_b, w1, b1, w2, b2, block_rows=64))
    ref_b = reference_forward(x_b, w1, b1, w2, b2)

    assert out_a.shape == (linear_nodes,) and out_b.shape == (linear_nodes,)
    assert jnp.allclose(out_a, ref_a, atol=2e-5, rtol=1e-4), (out_a, ref_a)
    assert jnp.allclose(out_b, ref_b, atol=2e-5, rtol=1e-4), (out_b, ref_b)

    print("KERNEL_OK")
</pallas_src>

<mosaic_0001>
module attributes {stable_mosaic.version = 11 : i64} {
  func.func @_aggregation_kernel(%arg0: i32, %arg1: i32, %arg2: memref<1xi32, #tpu.memory_space<smem>>, %arg3: memref<1000x15xf32, #tpu.memory_space<vmem>>, %arg4: memref<32x15xf32, #tpu.memory_space<vmem>>, %arg5: memref<16x1xf32, #tpu.memory_space<vmem>>, %arg6: memref<16x1xf32, #tpu.memory_space<vmem>>, %arg7: memref<1x1xf32, #tpu.memory_space<vmem>>, %arg8: memref<1x16x1xf32, #tpu.memory_space<vmem>>, %arg9: memref<16x1xf32, #tpu.memory_space<vmem>>) attributes {dimension_semantics = [#tpu.dimension_semantics<parallel>, #tpu.dimension_semantics<arbitrary>], iteration_bounds = array<i64: 2, 1>, scalar_prefetch = 1 : i64, scratch_operands = 1 : i64, tpu.core_type = #tpu.core_type<tc>, window_params = [{transform_indices = @transform_0, window_bounds = array<i64: 1000, 15>}, {pipeline_mode = #tpu.pipeline_mode<synchronous>, transform_indices = @transform_1, window_bounds = array<i64: 32, 15>}, {pipeline_mode = #tpu.pipeline_mode<synchronous>, transform_indices = @transform_2, window_bounds = array<i64: 16, 1>}, {pipeline_mode = #tpu.pipeline_mode<synchronous>, transform_indices = @transform_3, window_bounds = array<i64: 16, 1>}, {pipeline_mode = #tpu.pipeline_mode<synchronous>, transform_indices = @transform_4, window_bounds = array<i64: 1, 1>}, {transform_indices = @transform_5, window_bounds = array<i64: 1, 16, 1>}]} {
    %c0_i32 = arith.constant 0 : i32
    %0 = arith.cmpi eq, %arg1, %c0_i32 : i32
    %1 = arith.extui %0 : i1 to i32
    %c0_i32_0 = arith.constant 0 : i32
    %2 = arith.cmpi ne, %1, %c0_i32_0 : i32
    scf.if %2 {
      %cst_21 = arith.constant 0.000000e+00 : f32
      %45 = vector.broadcast %cst_21 : f32 to vector<16x1xf32>
      %c0_22 = arith.constant 0 : index
      %c0_23 = arith.constant 0 : index
      %46 = vector.load %arg9[%c0_22, %c0_23] : memref<16x1xf32, #tpu.memory_space<vmem>>, vector<16x1xf32>
      tpu.vector_store %arg9[%c0_22, %c0_23], %45 {strides = array<i32>} : memref<16x1xf32, #tpu.memory_space<vmem>>, vector<16x1xf32>,
    } else {
    }
    %c0 = arith.constant 0 : index
    %c0_1 = arith.constant 0 : index
    %3 = vector.load %arg3[%c0, %c0_1] : memref<1000x15xf32, #tpu.memory_space<vmem>>, vector<1000x15xf32>
    %c0_2 = arith.constant 0 : index
    %c0_3 = arith.constant 0 : index
    %4 = vector.load %arg4[%c0_2, %c0_3] : memref<32x15xf32, #tpu.memory_space<vmem>>, vector<32x15xf32>
    %cst = arith.constant dense<0.000000e+00> : vector<32x1000xf32>
    %5 = tpu.matmul %4, %3, %cst {dimension_numbers = #tpu.dot_dimension_numbers<[1], [1], [0], [0], [0, 0, 1, 0], [], []>} : vector<32x15xf32>, vector<1000x15xf32>, vector<32x1000xf32> -> vector<32x1000xf32>
    %6 = vector.extract_strided_slice %5 {offsets = [0, 0], sizes = [16, 1000], strides = [1, 1]} : vector<32x1000xf32> to vector<16x1000xf32>
    %7 = vector.extract_strided_slice %5 {offsets = [16, 0], sizes = [16, 1000], strides = [1, 1]} : vector<32x1000xf32> to vector<16x1000xf32>
    %c0_4 = arith.constant 0 : index
    %c0_5 = arith.constant 0 : index
    %8 = vector.load %arg5[%c0_4, %c0_5] : memref<16x1xf32, #tpu.memory_space<vmem>>, vector<16x1xf32>
    %9 = vector.broadcast %8 : vector<16x1xf32> to vector<16x1000xf32>
    %10 = arith.addf %7, %9 : vector<16x1000xf32>
    %11 = math.tanh %10 : vector<16x1000xf32>
    %c0_6 = arith.constant 0 : index
    %c0_7 = arith.constant 0 : index
    %12 = vector.load %arg6[%c0_6, %c0_7] : memref<16x1xf32, #tpu.memory_space<vmem>>, vector<16x1xf32>
    %13 = vector.broadcast %12 : vector<16x1xf32> to vector<16x1000xf32>
    %14 = arith.mulf %11, %13 : vector<16x1000xf32>
    %cst_8 = arith.constant dense<0.000000e+00> : vector<1000xf32>
    %15 = vector.multi_reduction <add>, %14, %cst_8 [0] : vector<16x1000xf32> to vector<1000xf32>
    %16 = vector.shape_cast %15 : vector<1000xf32> to vector<1x1000xf32>
    %c0_9 = arith.constant 0 : index
    %c0_10 = arith.constant 0 : index
    %17 = vector.load %arg7[%c0_9, %c0_10] : memref<1x1xf32, #tpu.memory_space<vmem>>, vector<1x1xf32>
    %18 = vector.broadcast %17 : vector<1x1xf32> to vector<1x1000xf32>
    %19 = arith.addf %16, %18 : vector<1x1000xf32>
    %c1_i32 = arith.constant 1 : i32
    %20 = arith.muli %arg0, %c1_i32 : i32
    %21 = arith.addi %20, %arg1 : i32
    %c1000_i32 = arith.constant 1000 : i32
    %22 = arith.muli %21, %c1000_i32 : i32
    %23 = tpu.iota {dimensions = array<i32: 1>} : vector<1x1000xi32>
    %24 = vector.broadcast %22 : i32 to vector<1x1000xi32>
    %25 = arith.addi %23, %24 : vector<1x1000xi32>
    %c0_11 = arith.constant 0 : index
    %26 = memref.load %arg2[%c0_11] : memref<1xi32, #tpu.memory_space<smem>>
    %27 = vector.broadcast %26 : i32 to vector<1x1000xi32>
    %28 = arith.cmpi slt, %25, %27 : vector<1x1000xi32>
    %cst_12 = arith.constant 0.000000e+00 : f32
    %29 = vector.broadcast %cst_12 : f32 to vector<1x1000xf32>
    %30 = arith.select %28, %19, %29 : vector<1x1000xi1>, vector<1x1000xf32>
    %cst_13 = arith.constant 0.000000e+00 : f32
    %31 = vector.shape_cast %28 : vector<1x1000xi1> to vector<1x1000xi1>
    %32 = vector.broadcast %31 : vector<1x1000xi1> to vector<16x1000xi1>
    %33 = vector.broadcast %cst_13 : f32 to vector<16x1000xf32>
    %34 = arith.select %32, %6, %33 : vector<16x1000xi1>, vector<16x1000xf32>
    %c0_14 = arith.constant 0 : index
    %c0_15 = arith.constant 0 : index
    %35 = vector.load %arg9[%c0_14, %c0_15] : memref<16x1xf32, #tpu.memory_space<vmem>>, vector<16x1xf32>
    %36 = vector.broadcast %30 : vector<1x1000xf32> to vector<16x1000xf32>
    %37 = arith.mulf %34, %36 : vector<16x1000xf32>
    %cst_16 = arith.constant dense<0.000000e+00> : vector<16xf32>
    %38 = vector.multi_reduction <add>, %37, %cst_16 [1] : vector<16x1000xf32> to vector<16xf32>
    %39 = vector.shape_cast %38 : vector<16xf32> to vector<16x1xf32>
    %40 = arith.addf %35, %39 : vector<16x1xf32>
    %c0_17 = arith.constant 0 : index
    %c0_18 = arith.constant 0 : index
    %41 = vector.load %arg9[%c0_17, %c0_18] : memref<16x1xf32, #tpu.memory_space<vmem>>, vector<16x1xf32>
    tpu.vector_store %arg9[%c0_17, %c0_18], %40 {strides = array<i32>} : memref<16x1xf32, #tpu.memory_space<vmem>>, vector<16x1xf32>,
    %c0_i32_19 = arith.constant 0 : i32
    %42 = arith.cmpi eq, %arg1, %c0_i32_19 : i32
    %43 = arith.extui %42 : i1 to i32
    %c0_i32_20 = arith.constant 0 : i32
    %44 = arith.cmpi ne, %43, %c0_i32_20 : i32
    scf.if %44 {
      %c0_21 = arith.constant 0 : index
      %45 = memref.load %arg2[%c0_21] : memref<1xi32, #tpu.memory_space<smem>>
      %46 = arith.sitofp %45 : i32 to f32
      %cst_22 = arith.constant 1.000000e+00 : f32
      %47 = arith.divf %cst_22, %46 : f32
      %c0_23 = arith.constant 0 : index
      %c0_24 = arith.constant 0 : index
      %48 = vector.load %arg9[%c0_23, %c0_24] : memref<16x1xf32, #tpu.memory_space<vmem>>, vector<16x1xf32>
      %49 = vector.broadcast %47 : f32 to vector<16x1xf32>
      %50 = arith.mulf %48, %49 : vector<16x1xf32>
      %c0_25 = arith.constant 0 : index
      %c0_26 = arith.constant 0 : index
      %c0_27 = arith.constant 0 : index
      %51 = vector.load %arg8[%c0_25, %c0_26, %c0_27] : memref<1x16x1xf32, #tpu.memory_space<vmem>>, vector<1x16x1xf32>
      %52 = vector.shape_cast %51 : vector<1x16x1xf32> to vector<16x1xf32>
      %53 = vector.shape_cast %50 : vector<16x1xf32> to vector<1x16x1xf32>
      tpu.vector_store %arg8[%c0_25, %c0_26, %c0_27], %53 {strides = array<i32>} : memref<1x16x1xf32, #tpu.memory_space<vmem>>, vector<1x16x1xf32>,
    } else {
    }
    return
  }
  func.func @transform_0(%arg0: i32, %arg1: i32, %arg2: memref<1xi32, #tpu.memory_space<smem>>) -> (i32, i32) {
    %c1_i32 = arith.constant 1 : i32
    %0 = arith.muli %arg0, %c1_i32 : i32
    %1 = arith.addi %0, %arg1 : i32
    %c0_i32 = arith.constant 0 : i32
    %2 = arith.minsi %1, %c0_i32 : i32
    %c0_i32_0 = arith.constant 0 : i32
    %c0_i32_1 = arith.constant 0 : i32
    return %2, %c0_i32_0 : i32, i32
  }
  func.func @transform_1(%arg0: i32, %arg1: i32, %arg2: memref<1xi32, #tpu.memory_space<smem>>) -> (i32, i32) {
    %c0_i32 = arith.constant 0 : i32
    %c0_i32_0 = arith.constant 0 : i32
    %c0_i32_1 = arith.constant 0 : i32
    return %c0_i32, %c0_i32_0 : i32, i32
  }
  func.func @transform_2(%arg0: i32, %arg1: i32, %arg2: memref<1xi32, #tpu.memory_space<smem>>) -> (i32, i32) {
    %c0_i32 = arith.constant 0 : i32
    %c0_i32_0 = arith.constant 0 : i32
    %c0_i32_1 = arith.constant 0 : i32
    return %c0_i32, %c0_i32_0 : i32, i32
  }
  func.func @transform_3(%arg0: i32, %arg1: i32, %arg2: memref<1xi32, #tpu.memory_space<smem>>) -> (i32, i32) {
    %c0_i32 = arith.constant 0 : i32
    %c0_i32_0 = arith.constant 0 : i32
    %c0_i32_1 = arith.constant 0 : i32
    return %c0_i32, %c0_i32_0 : i32, i32
  }
  func.func @transform_4(%arg0: i32, %arg1: i32, %arg2: memref<1xi32, #tpu.memory_space<smem>>) -> (i32, i32) {
    %c0_i32 = arith.constant 0 : i32
    %c0_i32_0 = arith.constant 0 : i32
    %c0_i32_1 = arith.constant 0 : i32
    return %c0_i32, %c0_i32_0 : i32, i32
  }
  func.func @transform_5(%arg0: i32, %arg1: i32, %arg2: memref<1xi32, #tpu.memory_space<smem>>) -> (i32, i32, i32) {
    %c0_i32 = arith.constant 0 : i32
    %c0_i32_0 = arith.constant 0 : i32
    %c0_i32_1 = arith.constant 0 : i32
    return %arg0, %c0_i32, %c0_i32_0 : i32, i32, i32
  }
}

</mosaic_0001>

<llo_original>
// kernel: tpu_custom_call.1
$region0: #{tpu_custom_call.1}
  #allocation0 [shape = 'u32[]', space=smem, size = 0x4, offset = 0x4, fixed_abs, tag = 'smem constant byte address 0x4 - core index']
  #allocation1 [shape = 'u32[144,128]{1,0:T(1,128)}', space=vmem, size = 0x12000, scoped, tag = 'internal scratch']
  #allocation2 [shape = 'f32[16,1]{1,0:T(8,128)}', space=vmem, size = 0x2000, scoped, tag = 'scratch operand']
  #allocation3 [shape = 's32[1]{0}', space=sflag, size = 0x4, scoped, tag = 'scoped memory for tpu_custom_call.1']
  #allocation4 [shape = 's32[1]{0:T(128)S(6)}', space=smem, size = 0x200, scoped, tag = 'prefetched SMEM operand 0']
  #allocation5 [shape = 'f32[1,1]{1,0:T(1,128)S(1)}', space=vmem, size = 0x200, scoped, tag = 'scoped memory for tpu_custom_call.1']
  %s0 = inlined_call_operand.<no memory space> [shape: s32[1], index: 0, kind: input, shape index: {}]
  %s1 = inlined_call_operand.vmem [shape: f32[1000,15], index: 1, kind: input, shape index: {}]
  %s2 = inlined_call_operand.vmem [shape: f32[32,15], index: 2, kind: input, shape index: {}]
  %s3 = inlined_call_operand.vmem [shape: f32[16,1], index: 3, kind: input, shape index: {}]
  %s4 = inlined_call_operand.vmem [shape: f32[16,1], index: 4, kind: input, shape index: {}]
  %s5 = inlined_call_operand.<no memory space> [shape: f32[1,1], index: 5, kind: input, shape index: {}]
  %s6 = inlined_call_operand.vmem [shape: f32[2,16,1], index: 6, kind: output, shape index: {}]
  %s7 = sld [smem:[#allocation0]]
  $region61: #{tpu_custom_call.1} parent=0
    _
  %s9 = ssub.s32 1, %s7
  %s10 = scalar_select 0, %s9, %s7
  %11 = sst [smem:[#allocation4]] %s0
  %v12 = vstv %s5
  %13 = vst [vmem:[#allocation5] sm:$0x1] %v12
  loop: start=0, step=1, limit=4
  $region2: #{tpu_custom_call.1} parent=0 // loop_pre_header
    _
  $region3: #{tpu_custom_call.1} parent=0 // loop_header
    %s15 = sphi 0, %s19
    %p16 = scmp.ge.s32.totalorder %s15, 4
    %s22 = sphi 0, %s34
    %s23 = sphi 0, %s30
    %s24 = sphi 0, %s22
    %s25 = sphi 0, %s23
    %s26 = sphi 0, %s24
    %s27 = sphi 0, %s25
    %s43 = sphi 0, %s45
    %s46 = sphi 0, %s43
    %s47 = sphi 0, %s46
    %s63 = sphi 0, %s47
    %s67 = sphi 0, %s67
    %s69 = sphi 0, %s67
    %s70 = sphi 0, %s69
    %s84 = sphi 0, %s70
    %s88 = sphi 0, %s88
    %s90 = sphi 0, %s88
    %s91 = sphi 0, %s90
    %s105 = sphi 0, %s91
    %s109 = sphi 0, %s109
    %s111 = sphi 0, %s109
    %s112 = sphi 0, %s111
    %s126 = sphi 0, %s112
    %s130 = sphi 0, %s130
    %s132 = sphi 0, %s130
    %s133 = sphi 0, %s132
    %s147 = sphi 0, %s133
    %s153 = sphi 0, %s155
    %s156 = sphi 0, %s153
    %s157 = sphi 0, %s156
    %s173 = sphi 0, %s157
  $region4: #{tpu_custom_call.1} parent=0 // loop_header_branch
    %18 = sbr.rel (%p16) target = $region8
  $region5: #{tpu_custom_call.1} parent=0 // loop_body
    %s20 = ssub.s32 %s15, 1
    %s21 = ssub.s32 %s15, 2
    %s28 = sadd.s32 1, %s23
    %p29 = scmp.ge.s32.totalorder %s28, 1
    %s30 = scalar_select %p29, 0, %s28
    %s31 = sadd.s32 1, %s22
    %s32 = scalar_select %p29, %s31, %s22
    %p33 = scmp.ge.s32.totalorder %s32, 2
    %s34 = scalar_select %p33, 0, %s32
    %s35 = sadd.s32 %s22, %s23
    %p36 = scmp.lt.s32.totalorder %s35, 0
    %s37 = scalar_select %p36, %s35, 0
    %s38 = sadd.s32 %s34, %s30
    %p39 = scmp.lt.s32.totalorder %s38, 0
    %s40 = scalar_select %p39, %s38, 0
    %s41 = ssub.s32 %s37, %s40
    %p42 = scmp.eq.s32.totalorder %s41, 0
    %s44 = sadd.s32 %s43, 1
    %s45 = scalar_select %p42, %s43, %s44
    %p48 = pneg %p42
    %p49 = scmp.eq.s32.totalorder %s15, 1
    %p50 = por %p48, %p49
    %p51 = scmp.ne.s32.totalorder %s43, %s46
    %p52 = scmp.eq.s32.totalorder %s15, 0
    %p53 = por %p51, %p52
    %p54 = scmp.ne.s32.totalorder %s43, %s46
    %p55 = scmp.eq.s32.totalorder %s20, 1
    %p56 = por %p54, %p55
    %p57 = scmp.ne.s32.totalorder %s46, %s47
    %p58 = scmp.eq.s32.totalorder %s20, 0
    %p59 = por %p57, %p58
    %p60 = scmp.ne.s32.totalorder %s46, %s47
    %p61 = scmp.eq.s32.totalorder %s21, 1
    %p62 = por %p60, %p61
    %p64 = scmp.ne.s32.totalorder %s47, %s63
    %p65 = scmp.eq.s32.totalorder %s21, 0
    %p66 = por %p64, %p65
    %s68 = sadd.s32 %s67, 1
    %p71 = scmp.eq.s32.totalorder %s15, 1
    %p72 = scmp.ne.s32.totalorder %s67, %s69
    %p73 = scmp.eq.s32.totalorder %s15, 0
    %p74 = por %p72, %p73
    %p75 = scmp.ne.s32.totalorder %s67, %s69
    %p76 = scmp.eq.s32.totalorder %s20, 1
    %p77 = por %p75, %p76
    %p78 = scmp.ne.s32.totalorder %s69, %s70
    %p79 = scmp.eq.s32.totalorder %s20, 0
    %p80 = por %p78, %p79
    %p81 = scmp.ne.s32.totalorder %s69, %s70
    %p82 = scmp.eq.s32.totalorder %s21, 1
    %p83 = por %p81, %p82
    %p85 = scmp.ne.s32.totalorder %s70, %s84
    %p86 = scmp.eq.s32.totalorder %s21, 0
    %p87 = por %p85, %p86
    %s89 = sadd.s32 %s88, 1
    %p92 = scmp.eq.s32.totalorder %s15, 1
    %p93 = scmp.ne.s32.totalorder %s88, %s90
    %p94 = scmp.eq.s32.totalorder %s15, 0
    %p95 = por %p93, %p94
    %p96 = scmp.ne.s32.totalorder %s88, %s90
    %p97 = scmp.eq.s32.totalorder %s20, 1
    %p98 = por %p96, %p97
    %p99 = scmp.ne.s32.totalorder %s90, %s91
    %p100 = scmp.eq.s32.totalorder %s20, 0
    %p101 = por %p99, %p100
    %p102 = scmp.ne.s32.totalorder %s90, %s91
    %p103 = scmp.eq.s32.totalorder %s21, 1
    %p104 = por %p102, %p103
    %p106 = scmp.ne.s32.totalorder %s91, %s105
    %p107 = scmp.eq.s32.totalorder %s21, 0
    %p108 = por %p106, %p107
    %s110 = sadd.s32 %s109, 1
    %p113 = scmp.eq.s32.totalorder %s15, 1
    %p114 = scmp.ne.s32.totalorder %s109, %s111
    %p115 = scmp.eq.s32.totalorder %s15, 0
    %p116 = por %p114, %p115
    %p117 = scmp.ne.s32.totalorder %s109, %s111
    %p118 = scmp.eq.s32.totalorder %s20, 1
    %p119 = por %p117, %p118
    %p120 = scmp.ne.s32.totalorder %s111, %s112
    %p121 = scmp.eq.s32.totalorder %s20, 0
    %p122 = por %p120, %p121
    %p123 = scmp.ne.s32.totalorder %s111, %s112
    %p124 = scmp.eq.s32.totalorder %s21, 1
    %p125 = por %p123, %p124
    %p127 = scmp.ne.s32.totalorder %s112, %s126
    %p128 = scmp.eq.s32.totalorder %s21, 0
    %p129 = por %p127, %p128
    %s131 = sadd.s32 %s130, 1
    %p134 = scmp.eq.s32.totalorder %s15, 1
    %p135 = scmp.ne.s32.totalorder %s130, %s132
    %p136 = scmp.eq.s32.totalorder %s15, 0
    %p137 = por %p135, %p136
    %p138 = scmp.ne.s32.totalorder %s130, %s132
    %p139 = scmp.eq.s32.totalorder %s20, 1
    %p140 = por %p138, %p139
    %p141 = scmp.ne.s32.totalorder %s132, %s133
    %p142 = scmp.eq.s32.totalorder %s20, 0
    %p143 = por %p141, %p142
    %p144 = scmp.ne.s32.totalorder %s132, %s133
    %p145 = scmp.eq.s32.totalorder %s21, 1
    %p146 = por %p144, %p145
    %p148 = scmp.ne.s32.totalorder %s133, %s147
    %p149 = scmp.eq.s32.totalorder %s21, 0
    %p150 = por %p148, %p149
    %s151 = ssub.s32 %s22, %s34
    %p152 = scmp.eq.s32.totalorder %s151, 0
    %s154 = sadd.s32 %s153, 1
    %s155 = scalar_select %p152, %s153, %s154
    %p158 = pneg %p152
    %p159 = scmp.eq.s32.totalorder %s15, 1
    %p160 = por %p158, %p159
    %p161 = scmp.ne.s32.totalorder %s153, %s156
    %p162 = scmp.eq.s32.totalorder %s15, 0
    %p163 = por %p161, %p162
    %p164 = scmp.ne.s32.totalorder %s153, %s156
    %p165 = scmp.eq.s32.totalorder %s20, 1
    %p166 = por %p164, %p165
    %p167 = scmp.ne.s32.totalorder %s156, %s157
    %p168 = scmp.eq.s32.totalorder %s20, 0
    %p169 = por %p167, %p168
    %p170 = scmp.ne.s32.totalorder %s156, %s157
    %p171 = scmp.eq.s32.totalorder %s21, 1
    %p172 = por %p170, %p171
    %p174 = scmp.ne.s32.totalorder %s157, %s173
    %p175 = scmp.eq.s32.totalorder %s21, 0
    %p176 = por %p174, %p175
    %p177 = scmp.le.s32.totalorder 1, %s15
    %p178 = scmp.lt.s32.totalorder %s15, 3
    %p179 = pnand %p177, %p178
    %p180 = pneg %p179
    // Predicated region
    $region9: #{tpu_custom_call.1} parent=5 // pred_check
      _
    $region10: #{tpu_custom_call.1} parent=5 // pred_check_branch
      %182 = sbr.rel (%p179) target = $region12
    $region11: #{tpu_custom_call.1} parent=5 // pred_region
      %s183 = ssub.s32 %s15, 1
      // Predicated region
      $region13: #{tpu_custom_call.1} parent=11 // pred_check
        %p184 = pneg %p80
      $region14: #{tpu_custom_call.1} parent=11 // pred_check_branch
        %186 = sbr.rel (%p184) target = $region16
      $region15: #{tpu_custom_call.1} parent=11 // pred_region
        _
      $region16: #{tpu_custom_call.1} parent=11 // pred_fallthru
        _
      // Predicated region
      $region17: #{tpu_custom_call.1} parent=11 // pred_check
        %p187 = pneg %p101
      $region18: #{tpu_custom_call.1} parent=11 // pred_check_branch
        %189 = sbr.rel (%p187) target = $region20
      $region19: #{tpu_custom_call.1} parent=11 // pred_region
        _
      $region20: #{tpu_custom_call.1} parent=11 // pred_fallthru
        _
      // Predicated region
      $region21: #{tpu_custom_call.1} parent=11 // pred_check
        %p190 = pneg %p122
      $region22: #{tpu_custom_call.1} parent=11 // pred_check_branch
        %192 = sbr.rel (%p190) target = $region24
      $region23: #{tpu_custom_call.1} parent=11 // pred_region
        _
      $region24: #{tpu_custom_call.1} parent=11 // pred_fallthru
        _
      // Predicated region
      $region25: #{tpu_custom_call.1} parent=11 // pred_check
        %p193 = pneg %p143
      $region26: #{tpu_custom_call.1} parent=11 // pred_check_branch
        %195 = sbr.rel (%p193) target = $region28
      $region27: #{tpu_custom_call.1} parent=11 // pred_region
        _
      $region28: #{tpu_custom_call.1} parent=11 // pred_fallthru
        _
    $region12: #{tpu_custom_call.1} parent=5 // pred_fallthru
      _
    %p196 = scmp.lt.s32.totalorder %s15, 2
    // Predicated region
    $region29: #{tpu_custom_call.1} parent=5 // pred_check
      %p197 = pneg %p196
    $region30: #{tpu_custom_call.1} parent=5 // pred_check_branch
      %199 = sbr.rel (%p197) target = $region32
    $region31: #{tpu_custom_call.1} parent=5 // pred_region
      // Predicated region
      $region33: #{tpu_custom_call.1} parent=31 // pred_check
        %p200 = pneg %p53
      $region34: #{tpu_custom_call.1} parent=31 // pred_check_branch
        %202 = sbr.rel (%p200) target = $region36
      $region35: #{tpu_custom_call.1} parent=31 // pred_region
        %s203 = sadd.s32 %s22, %s23
        %p204 = scmp.lt.s32.totalorder %s203, 0
        %s205 = scalar_select %p204, %s203, 0
        %s206 = smul.u32 125, %s205
        %p207 = scmp.lt.s32.totalorder %s206, 124
        %s208 = scalar_select %p207, %s206, 124
        %s209 = smul.addr %s208, 8
        %s210 = scalar_lea.vmem %s1, %s209
        %s211 = sadd.s32 %s22, %s23
        %p212 = scmp.lt.s32.totalorder %s211, 0
        %s213 = scalar_select %p212, %s211, 0
        %s214 = smul.u32 125, %s213
      $region36: #{tpu_custom_call.1} parent=31 // pred_fallthru
        _
    $region32: #{tpu_custom_call.1} parent=5 // pred_fallthru
      _
    %p215 = scmp.le.s32.totalorder 1, %s15
    %p216 = scmp.lt.s32.totalorder %s15, 3
    %p217 = pnand %p215, %p216
    %p218 = pneg %p217
    // Predicated region
    $region37: #{tpu_custom_call.1} parent=5 // pred_check
      _
    $region38: #{tpu_custom_call.1} parent=5 // pred_check_branch
      %220 = sbr.rel (%p217) target = $region40
    $region39: #{tpu_custom_call.1} parent=5 // pred_region
      %s221 = ssub.s32 %s15, 1
      %s222 = sadd.s32 %s24, %s25
      %p223 = scmp.lt.s32.totalorder %s222, 0
      %s224 = scalar_select %p223, %s222, 0
      %s225 = smul.u32 125, %s224
      %p226 = scmp.lt.s32.totalorder %s225, 124
      %s227 = scalar_select %p226, %s225, 124
      %s228 = smul.addr %s227, 8
      %s229 = scalar_lea.vmem %s1, %s228
      %p230 = pneg %p59
      %p231 = pneg %p56
      %p232 = pneg %p80
      %p233 = pneg %p77
      %p234 = pneg %p101
      %p235 = pneg %p98
      %p236 = pneg %p122
      %p237 = pneg %p119
      %p238 = pneg %p143
      %p239 = pneg %p140
      %p240 = pneg %p169
      %p241 = pneg %p166
      %p242 = scmp.lt.s32.totalorder %s24, 1
      %s243 = scalar_select %p242, %s24, 1
      %s244 = smul.addr %s243, 2
      %s245 = smul.addr %s244, 8
      %s246 = scalar_lea.vmem %s6, %s245
      %s247 = sadd.s32 %s24, %s25
      %p248 = scmp.lt.s32.totalorder %s247, 0
      %s249 = scalar_select %p248, %s247, 0
      %s250 = smul.u32 125, %s249
      %p251 = scmp.lt.s32.totalorder %s250, 124
      %s252 = scalar_select %p251, %s250, 124
      %s253 = smul.addr %s252, 8
      %s254 = scalar_lea.vmem %s1, %s253
      %s255 = sadd.s32 %s24, %s25
      %p256 = scmp.lt.s32.totalorder %s255, 0
      %s257 = scalar_select %p256, %s255, 0
      %s258 = smul.u32 125, %s257
      %p259 = scmp.lt.s32.totalorder %s24, 1
      %s260 = scalar_select %p259, %s24, 1
      %s261 = smul.addr %s260, 2
      %s262 = smul.addr %s261, 8
      %s263 = scalar_lea.vmem %s6, %s262
      %p264 = scmp.eq.s32.totalorder %s25, 0
      // Predicated region
      $region41: #{tpu_custom_call.1} parent=39 // pred_check
        %p265 = pneg %p264
      $region42: #{tpu_custom_call.1} parent=39 // pred_check_branch
        %267 = sbr.rel (%p265) target = $region44
      $region43: #{tpu_custom_call.1} parent=39 // pred_region
        %vm268 = vcmask 7168
        %269 = vst.msk [vmem:[#allocation2] sm:$0xff] %vm268, 0.0
        %270 = vst.msk [vmem:[#allocation2 + $0x8] sm:$0xff] %vm268, 0.0
      $region44: #{tpu_custom_call.1} parent=39 // pred_fallthru
        _
      %v271 = vld [vmem:[%s254] sm:$0xff]
      %v272 = vld [vmem:[%s254 + $0x8] sm:$0xff]
      %v273 = vld [vmem:[%s254 + $0x10] sm:$0xff]
      %v274 = vld [vmem:[%s254 + $0x18] sm:$0xff]
      %v275 = vld [vmem:[%s254 + $0x20] sm:$0xff]
      %v276 = vld [vmem:[%s254 + $0x28] sm:$0xff]
      %v277 = vld [vmem:[%s254 + $0x30] sm:$0xff]
      %v278 = vld [vmem:[%s254 + $0x38] sm:$0xff]
      %v279 = vld [vmem:[%s254 + $0x40] sm:$0xff]
      %v280 = vld [vmem:[%s254 + $0x48] sm:$0xff]
      %v281 = vld [vmem:[%s254 + $0x50] sm:$0xff]
      %v282 = vld [vmem:[%s254 + $0x58] sm:$0xff]
      %v283 = vld [vmem:[%s254 + $0x60] sm:$0xff]
      %v284 = vld [vmem:[%s254 + $0x68] sm:$0xff]
      %v285 = vld [vmem:[%s254 + $0x70] sm:$0xff]
      %v286 = vld [vmem:[%s254 + $0x78] sm:$0xff]
      %v287 = vld [vmem:[%s254 + $0x80] sm:$0xff]
      %v288 = vld [vmem:[%s254 + $0x88] sm:$0xff]
      %v289 = vld [vmem:[%s254 + $0x90] sm:$0xff]
      %v290 = vld [vmem:[%s254 + $0x98] sm:$0xff]
      %v291 = vld [vmem:[%s254 + $0xa0] sm:$0xff]
      %v292 = vld [vmem:[%s254 + $0xa8] sm:$0xff]
      %v293 = vld [vmem:[%s254 + $0xb0] sm:$0xff]
      %v294 = vld [vmem:[%s254 + $0xb8] sm:$0xff]
      %v295 = vld [vmem:[%s254 + $0xc0] sm:$0xff]
      %v296 = vld [vmem:[%s254 + $0xc8] sm:$0xff]
      %v297 = vld [vmem:[%s254 + $0xd0] sm:$0xff]
      %v298 = vld [vmem:[%s254 + $0xd8] sm:$0xff]
      %v299 = vld [vmem:[%s254 + $0xe0] sm:$0xff]
      %v300 = vld [vmem:[%s254 + $0xe8] sm:$0xff]
      %v301 = vld [vmem:[%s254 + $0xf0] sm:$0xff]
      %v302 = vld [vmem:[%s254 + $0xf8] sm:$0xff]
      %v303 = vld [vmem:[%s254 + $0x100] sm:$0xff]
      %v304 = vld [vmem:[%s254 + $0x108] sm:$0xff]
      %v305 = vld [vmem:[%s254 + $0x110] sm:$0xff]
      %v306 = vld [vmem:[%s254 + $0x118] sm:$0xff]
      %v307 = vld [vmem:[%s254 + $0x120] sm:$0xff]
      %v308 = vld [vmem:[%s254 + $0x128] sm:$0xff]
      %v309 = vld [vmem:[%s254 + $0x130] sm:$0xff]
      %v310 = vld [vmem:[%s254 + $0x138] sm:$0xff]
      %v311 = vld [vmem:[%s254 + $0x140] sm:$0xff]
      %v312 = vld [vmem:[%s254 + $0x148] sm:$0xff]
      %v313 = vld [vmem:[%s254 + $0x150] sm:$0xff]
      %v314 = vld [vmem:[%s254 + $0x158] sm:$0xff]
      %v315 = vld [vmem:[%s254 + $0x160] sm:$0xff]
      %v316 = vld [vmem:[%s254 + $0x168] sm:$0xff]
      %v317 = vld [vmem:[%s254 + $0x170] sm:$0xff]
      %v318 = vld [vmem:[%s254 + $0x178] sm:$0xff]
      %v319 = vld [vmem:[%s254 + $0x180] sm:$0xff]
      %v320 = vld [vmem:[%s254 + $0x188] sm:$0xff]
      %v321 = vld [vmem:[%s254 + $0x190] sm:$0xff]
      %v322 = vld [vmem:[%s254 + $0x198] sm:$0xff]
      %v323 = vld [vmem:[%s254 + $0x1a0] sm:$0xff]
      %v324 = vld [vmem:[%s254 + $0x1a8] sm:$0xff]
      %v325 = vld [vmem:[%s254 + $0x1b0] sm:$0xff]
      %v326 = vld [vmem:[%s254 + $0x1b8] sm:$0xff]
      %v327 = vld [vmem:[%s254 + $0x1c0] sm:$0xff]
      %v328 = vld [vmem:[%s254 + $0x1c8] sm:$0xff]
      %v329 = vld [vmem:[%s254 + $0x1d0] sm:$0xff]
      %v330 = vld [vmem:[%s254 + $0x1d8] sm:$0xff]
      %v331 = vld [vmem:[%s254 + $0x1e0] sm:$0xff]
      %v332 = vld [vmem:[%s254 + $0x1e8] sm:$0xff]
      %v333 = vld [vmem:[%s254 + $0x1f0] sm:$0xff]
      %v334 = vld [vmem:[%s254 + $0x1f8] sm:$0xff]
      %v335 = vld [vmem:[%s254 + $0x200] sm:$0xff]
      %v336 = vld [vmem:[%s254 + $0x208] sm:$0xff]
      %v337 = vld [vmem:[%s254 + $0x210] sm:$0xff]
      %v338 = vld [vmem:[%s254 + $0x218] sm:$0xff]
      %v339 = vld [vmem:[%s254 + $0x220] sm:$0xff]
      %v340 = vld [vmem:[%s254 + $0x228] sm:$0xff]
      %v341 = vld [vmem:[%s254 + $0x230] sm:$0xff]
      %v342 = vld [vmem:[%s254 + $0x238] sm:$0xff]
      %v343 = vld [vmem:[%s254 + $0x240] sm:$0xff]
      %v344 = vld [vmem:[%s254 + $0x248] sm:$0xff]
      %v345 = vld [vmem:[%s254 + $0x250] sm:$0xff]
      %v346 = vld [vmem:[%s254 + $0x258] sm:$0xff]
      %v347 = vld [vmem:[%s254 + $0x260] sm:$0xff]
      %v348 = vld [vmem:[%s254 + $0x268] sm:$0xff]
      %v349 = vld [vmem:[%s254 + $0x270] sm:$0xff]
      %v350 = vld [vmem:[%s254 + $0x278] sm:$0xff]
      %v351 = vld [vmem:[%s254 + $0x280] sm:$0xff]
      %v352 = vld [vmem:[%s254 + $0x288] sm:$0xff]
      %v353 = vld [vmem:[%s254 + $0x290] sm:$0xff]
      %v354 = vld [vmem:[%s254 + $0x298] sm:$0xff]
      %v355 = vld [vmem:[%s254 + $0x2a0] sm:$0xff]
      %v356 = vld [vmem:[%s254 + $0x2a8] sm:$0xff]
      %v357 = vld [vmem:[%s254 + $0x2b0] sm:$0xff]
      %v358 = vld [vmem:[%s254 + $0x2b8] sm:$0xff]
      %v359 = vld [vmem:[%s254 + $0x2c0] sm:$0xff]
      %v360 = vld [vmem:[%s254 + $0x2c8] sm:$0xff]
      %v361 = vld [vmem:[%s254 + $0x2d0] sm:$0xff]
      %v362 = vld [vmem:[%s254 + $0x2d8] sm:$0xff]
      %v363 = vld [vmem:[%s254 + $0x2e0] sm:$0xff]
      %v364 = vld [vmem:[%s254 + $0x2e8] sm:$0xff]
      %v365 = vld [vmem:[%s254 + $0x2f0] sm:$0xff]
      %v366 = vld [vmem:[%s254 + $0x2f8] sm:$0xff]
      %v367 = vld [vmem:[%s254 + $0x300] sm:$0xff]
      %v368 = vld [vmem:[%s254 + $0x308] sm:$0xff]
      %v369 = vld [vmem:[%s254 + $0x310] sm:$0xff]
      %v370 = vld [vmem:[%s254 + $0x318] sm:$0xff]
      %v371 = vld [vmem:[%s254 + $0x320] sm:$0xff]
      %v372 = vld [vmem:[%s254 + $0x328] sm:$0xff]
      %v373 = vld [vmem:[%s254 + $0x330] sm:$0xff]
      %v374 = vld [vmem:[%s254 + $0x338] sm:$0xff]
      %v375 = vld [vmem:[%s254 + $0x340] sm:$0xff]
      %v376 = vld [vmem:[%s254 + $0x348] sm:$0xff]
      %v377 = vld [vmem:[%s254 + $0x350] sm:$0xff]
      %v378 = vld [vmem:[%s254 + $0x358] sm:$0xff]
      %v379 = vld [vmem:[%s254 + $0x360] sm:$0xff]
      %v380 = vld [vmem:[%s254 + $0x368] sm:$0xff]
      %v381 = vld [vmem:[%s254 + $0x370] sm:$0xff]
      %v382 = vld [vmem:[%s254 + $0x378] sm:$0xff]
      %v383 = vld [vmem:[%s254 + $0x380] sm:$0xff]
      %v384 = vld [vmem:[%s254 + $0x388] sm:$0xff]
      %v385 = vld [vmem:[%s254 + $0x390] sm:$0xff]
      %v386 = vld [vmem:[%s254 + $0x398] sm:$0xff]
      %v387 = vld [vmem:[%s254 + $0x3a0] sm:$0xff]
      %v388 = vld [vmem:[%s254 + $0x3a8] sm:$0xff]
      %v389 = vld [vmem:[%s254 + $0x3b0] sm:$0xff]
      %v390 = vld [vmem:[%s254 + $0x3b8] sm:$0xff]
      %v391 = vld [vmem:[%s254 + $0x3c0] sm:$0xff]
      %v392 = vld [vmem:[%s254 + $0x3c8] sm:$0xff]
      %v393 = vld [vmem:[%s254 + $0x3d0] sm:$0xff]
      %v394 = vld [vmem:[%s254 + $0x3d8] sm:$0xff]
      %v395 = vld [vmem:[%s254 + $0x3e0] sm:$0xff]
      %v396 = vld [vmem:[%s2] sm:$0xff]
      %v397 = vld [vmem:[%s2 + $0x8] sm:$0xff]
      %v398 = vld [vmem:[%s2 + $0x10] sm:$0xff]
      %v399 = vld [vmem:[%s2 + $0x18] sm:$0xff]
      %vm400 = vcmask 121856
      %v402 = vsel %vm400, %v396, 0
      %v405 = vsel %vm400, %v397, 0
      %v408 = vsel %vm400, %v398, 0
      %v411 = vsel %vm400, %v399, 0
      %v414 = vsel %vm400, %v271, 0
      %v417 = vsel %vm400, %v272, 0
      %v420 = vsel %vm400, %v273, 0
      %v423 = vsel %vm400, %v274, 0
      %v426 = vsel %vm400, %v275, 0
      %v429 = vsel %vm400, %v276, 0
      %v432 = vsel %vm400, %v277, 0
      %v435 = vsel %vm400, %v278, 0
      %v438 = vsel %vm400, %v279, 0
      %v441 = vsel %vm400, %v280, 0
      %v444 = vsel %vm400, %v281, 0
      %v447 = vsel %vm400, %v282, 0
      %v450 = vsel %vm400, %v283, 0
      %v453 = vsel %vm400, %v284, 0
      %v456 = vsel %vm400, %v285, 0
      %v459 = vsel %vm400, %v286, 0
      %v462 = vsel %vm400, %v287, 0
      %v465 = vsel %vm400, %v288, 0
      %v468 = vsel %vm400, %v289, 0
      %v471 = vsel %vm400, %v290, 0
      %v474 = vsel %vm400, %v291, 0
      %v477 = vsel %vm400, %v292, 0
      %v480 = vsel %vm400, %v293, 0
      %v483 = vsel %vm400, %v294, 0
      %v486 = vsel %vm400, %v295, 0
      %v489 = vsel %vm400, %v296, 0
      %v492 = vsel %vm400, %v297, 0
      %v495 = vsel %vm400, %v298, 0
      %v498 = vsel %vm400, %v299, 0
      %v501 = vsel %vm400, %v300, 0
      %v504 = vsel %vm400, %v301, 0
      %v507 = vsel %vm400, %v302, 0
      %v510 = vsel %vm400, %v303, 0
      %v513 = vsel %vm400, %v304, 0
      %v516 = vsel %vm400, %v305, 0
      %v519 = vsel %vm400, %v306, 0
      %v522 = vsel %vm400, %v307, 0
      %v525 = vsel %vm400, %v308, 0
      %v528 = vsel %vm400, %v309, 0
      %v531 = vsel %vm400, %v310, 0
      %v534 = vsel %vm400, %v311, 0
      %v537 = vsel %vm400, %v312, 0
      %v540 = vsel %vm400, %v313, 0
      %v543 = vsel %vm400, %v314, 0
      %v546 = vsel %vm400, %v315, 0
      %v549 = vsel %vm400, %v316, 0
      %v552 = vsel %vm400, %v317, 0
      %v555 = vsel %vm400, %v318, 0
      %v558 = vsel %vm400, %v319, 0
      %v561 = vsel %vm400, %v320, 0
      %v564 = vsel %vm400, %v321, 0
      %v567 = vsel %vm400, %v322, 0
      %v570 = vsel %vm400, %v323, 0
      %v573 = vsel %vm400, %v324, 0
      %v576 = vsel %vm400, %v325, 0
      %v579 = vsel %vm400, %v326, 0
      %v582 = vsel %vm400, %v327, 0
      %v585 = vsel %vm400, %v328, 0
      %v588 = vsel %vm400, %v329, 0
      %v591 = vsel %vm400, %v330, 0
      %v594 = vsel %vm400, %v331, 0
      %v597 = vsel %vm400, %v332, 0
      %v600 = vsel %vm400, %v333, 0
      %v603 = vsel %vm400, %v334, 0
      %v606 = vsel %vm400, %v335, 0
      %v609 = vsel %vm400, %v336, 0
      %v612 = vsel %vm400, %v337, 0
      %v615 = vsel %vm400, %v338, 0
      %v618 = vsel %vm400, %v339, 0
      %v621 = vsel %vm400, %v340, 0
      %v624 = vsel %vm400, %v341, 0
      %v627 = vsel %vm400, %v342, 0
      %v630 = vsel %vm400, %v343, 0
      %v633 = vsel %vm400, %v344, 0
      %v636 = vsel %vm400, %v345, 0
      %v639 = vsel %vm400, %v346, 0
      %v642 = vsel %vm400, %v347, 0
      %v645 = vsel %vm400, %v348, 0
      %v648 = vsel %vm400, %v349, 0
      %v651 = vsel %vm400, %v350, 0
      %v654 = vsel %vm400, %v351, 0
      %v657 = vsel %vm400, %v352, 0
      %v660 = vsel %vm400, %v353, 0
      %v663 = vsel %vm400, %v354, 0
      %v666 = vsel %vm400, %v355, 0
      %v669 = vsel %vm400, %v356, 0
      %v672 = vsel %vm400, %v357, 0
      %v675 = vsel %vm400, %v358, 0
      %v678 = vsel %vm400, %v359, 0
      %v681 = vsel %vm400, %v360, 0
      %v684 = vsel %vm400, %v361, 0
      %v687 = vsel %vm400, %v362, 0
      %v690 = vsel %vm400, %v363, 0
      %v693 = vsel %vm400, %v364, 0
      %v696 = vsel %vm400, %v365, 0
      %v699 = vsel %vm400, %v366, 0
      %v702 = vsel %vm400, %v367, 0
      %v705 = vsel %vm400, %v368, 0
      %v708 = vsel %vm400, %v369, 0
      %v711 = vsel %vm400, %v370, 0
      %v714 = vsel %vm400, %v371, 0
      %v717 = vsel %vm400, %v372, 0
      %v720 = vsel %vm400, %v373, 0
      %v723 = vsel %vm400, %v374, 0
      %v726 = vsel %vm400, %v375, 0
      %v729 = vsel %vm400, %v376, 0
      %v732 = vsel %vm400, %v377, 0
      %v735 = vsel %vm400, %v378, 0
      %v738 = vsel %vm400, %v379, 0
      %v741 = vsel %vm400, %v380, 0
      %v744 = vsel %vm400, %v381, 0
      %v747 = vsel %vm400, %v382, 0
      %v750 = vsel %vm400, %v383, 0
      %v753 = vsel %vm400, %v384, 0
      %v756 = vsel %vm400, %v385, 0
      %v759 = vsel %vm400, %v386, 0
      %v762 = vsel %vm400, %v387, 0
      %v765 = vsel %vm400, %v388, 0
      %v768 = vsel %vm400, %v389, 0
      %v771 = vsel %vm400, %v390, 0
      %v774 = vsel %vm400, %v391, 0
      %v777 = vsel %vm400, %v392, 0
      %v780 = vsel %vm400, %v393, 0
      %v783 = vsel %vm400, %v394, 0
      %v786 = vsel %vm400, %v395, 0
      %788 = vmatprep.subr.mxu0 0.0
      %789 = vmatpush1.xpose.msra.mxu0 %v459
      %790 = vmatprep.subr.mxu0 0.0
      %791 = vmatpush1.xpose.msra.mxu0 %v456
      %792 = vmatprep.subr.mxu0 0.0
      %793 = vmatpush1.xpose.msra.mxu0 %v453
      %794 = vmatprep.subr.mxu0 0.0
      %795 = vmatpush1.xpose.msra.mxu0 %v450
      %796 = vmatprep.subr.mxu0 0.0
      %797 = vmatpush1.xpose.msra.mxu0 %v447
      %798 = vmatprep.subr.mxu0 0.0
      %799 = vmatpush1.xpose.msra.mxu0 %v444
      %800 = vmatprep.subr.mxu0 0.0
      %801 = vmatpush1.xpose.msra.mxu0 %v441
      %802 = vmatprep.subr.mxu0 0.0
      %803 = vmatpush1.xpose.msra.mxu0 %v438
      %804 = vmatprep.subr.mxu0 0.0
      %805 = vmatpush1.xpose.msra.mxu0 %v435
      %806 = vmatprep.subr.mxu0 0.0
      %807 = vmatpush1.xpose.msra.mxu0 %v432
      %808 = vmatprep.subr.mxu0 0.0
      %809 = vmatpush1.xpose.msra.mxu0 %v429
      %810 = vmatprep.subr.mxu0 0.0
      %811 = vmatpush1.xpose.msra.mxu0 %v426
      %812 = vmatprep.subr.mxu0 0.0
      %813 = vmatpush1.xpose.msra.mxu0 %v423
      %814 = vmatprep.subr.mxu0 0.0
      %815 = vmatpush1.xpose.msra.mxu0 %v420
      %816 = vmatprep.subr.mxu0 0.0
      %817 = vmatpush1.xpose.msra.mxu0 %v417
      %818 = vmatprep.subr.mxu0 0.0
      %819 = vmatpush1.xpose.msra.mxu0 %v414
      %820 = vmatprep.subr.mxu0 0.0
      %821 = vmatpush2.xpose.msra.mxu0 %v507
      %822 = vmatprep.subr.mxu0 0.0
      %823 = vmatpush2.xpose.msra.mxu0 %v504
      %824 = vmatprep.subr.mxu0 0.0
      %825 = vmatpush2.xpose.msra.mxu0 %v501
      %826 = vmatprep.subr.mxu0 0.0
      %827 = vmatpush2.xpose.msra.mxu0 %v498
      %828 = vmatprep.subr.mxu0 0.0
      %829 = vmatpush2.xpose.msra.mxu0 %v495
      %830 = vmatprep.subr.mxu0 0.0
      %831 = vmatpush2.xpose.msra.mxu0 %v492
      %832 = vmatprep.subr.mxu0 0.0
      %833 = vmatpush2.xpose.msra.mxu0 %v489
      %834 = vmatprep.subr.mxu0 0.0
      %835 = vmatpush2.xpose.msra.mxu0 %v486
      %836 = vmatprep.subr.mxu0 0.0
      %837 = vmatpush2.xpose.msra.mxu0 %v483
      %838 = vmatprep.subr.mxu0 0.0
      %839 = vmatpush2.xpose.msra.mxu0 %v480
      %840 = vmatprep.subr.mxu0 0.0
      %841 = vmatpush2.xpose.msra.mxu0 %v477
      %842 = vmatprep.subr.mxu0 0.0
      %843 = vmatpush2.xpose.msra.mxu0 %v474
      %844 = vmatprep.subr.mxu0 0.0
      %845 = vmatpush2.xpose.msra.mxu0 %v471
      %846 = vmatprep.subr.mxu0 0.0
      %847 = vmatpush2.xpose.msra.mxu0 %v468
      %848 = vmatprep.subr.mxu0 0.0
      %849 = vmatpush2.xpose.msra.mxu0 %v465
      %850 = vmatprep.subr.mxu0 0.0
      %851 = vmatpush2.xpose.msra.mxu0 %v462
      %852 = vmatprep.mubr.f32.mxu0 0.0
      %853 = vmatmul.mubr.f32.gmra.mxu0 %v402
      %v854 = vpop.f32.mrf.mxu0
      %v855 = vadd.f32 0.0, %v854
      %v856 = vpop.f32.mrf.mxu0
      %v857 = vadd.f32 0.0, %v856
      %858 = vmatprep.mubr.f32.mxu0 0.0
      %859 = vmatmul.mubr.f32.gmra.mxu0 %v405
      %v860 = vpop.f32.mrf.mxu0
      %v861 = vadd.f32 0.0, %v860
      %v862 = vpop.f32.mrf.mxu0
      %v863 = vadd.f32 0.0, %v862
      %864 = vmatprep.mubr.f32.mxu0 0.0
      %865 = vmatmul.mubr.f32.gmra.mxu0 %v408
      %v866 = vpop.f32.mrf.mxu0
      %v867 = vadd.f32 0.0, %v866
      %v868 = vpop.f32.mrf.mxu0
      %v869 = vadd.f32 0.0, %v868
      %870 = vmatprep.mubr.f32.mxu0 0.0
      %871 = vmatmul.mubr.f32.gmra.mxu0 %v411
      %v872 = vpop.f32.mrf.mxu0
      %v873 = vadd.f32 0.0, %v872
      %v874 = vpop.f32.mrf.mxu0
      %v875 = vadd.f32 0.0, %v874
      %876 = vdwg.mxu0
      %877 = vmatprep.subr.mxu0 0.0
      %878 = vmatpush1.xpose.msra.mxu0 %v555
      %879 = vmatprep.subr.mxu0 0.0
      %880 = vmatpush1.xpose.msra.mxu0 %v552
      %881 = vmatprep.subr.mxu0 0.0
      %882 = vmatpush1.xpose.msra.mxu0 %v549
      %883 = vmatprep.subr.mxu0 0.0
      %884 = vmatpush1.xpose.msra.mxu0 %v546
      %885 = vmatprep.subr.mxu0 0.0
      %886 = vmatpush1.xpose.msra.mxu0 %v543
      %887 = vmatprep.subr.mxu0 0.0
      %888 = vmatpush1.xpose.msra.mxu0 %v540
      %889 = vmatprep.subr.mxu0 0.0
      %890 = vmatpush1.xpose.msra.mxu0 %v537
      %891 = vmatprep.subr.mxu0 0.0
      %892 = vmatpush1.xpose.msra.mxu0 %v534
      %893 = vmatprep.subr.mxu0 0.0
      %894 = vmatpush1.xpose.msra.mxu0 %v531
      %895 = vmatprep.subr.mxu0 0.0
      %896 = vmatpush1.xpose.msra.mxu0 %v528
      %897 = vmatprep.subr.mxu0 0.0
      %898 = vmatpush1.xpose.msra.mxu0 %v525
      %899 = vmatprep.subr.mxu0 0.0
      %900 = vmatpush1.xpose.msra.mxu0 %v522
      %901 = vmatprep.subr.mxu0 0.0
      %902 = vmatpush1.xpose.msra.mxu0 %v519
      %903 = vmatprep.subr.mxu0 0.0
      %904 = vmatpush1.xpose.msra.mxu0 %v516
      %905 = vmatprep.subr.mxu0 0.0
      %906 = vmatpush1.xpose.msra.mxu0 %v513
      %907 = vmatprep.subr.mxu0 0.0
      %908 = vmatpush1.xpose.msra.mxu0 %v510
      %909 = vmatprep.subr.mxu0 0.0
      %910 = vmatpush2.xpose.msra.mxu0 %v603
      %911 = vmatprep.subr.mxu0 0.0
      %912 = vmatpush2.xpose.msra.mxu0 %v600
      %913 = vmatprep.subr.mxu0 0.0
      %914 = vmatpush2.xpose.msra.mxu0 %v597
      %915 = vmatprep.subr.mxu0 0.0
      %916 = vmatpush2.xpose.msra.mxu0 %v594
      %917 = vmatprep.subr.mxu0 0.0
      %918 = vmatpush2.xpose.msra.mxu0 %v591
      %919 = vmatprep.subr.mxu0 0.0
      %920 = vmatpush2.xpose.msra.mxu0 %v588
      %921 = vmatprep.subr.mxu0 0.0
      %922 = vmatpush2.xpose.msra.mxu0 %v585
      %923 = vmatprep.subr.mxu0 0.0
      %924 = vmatpush2.xpose.msra.mxu0 %v582
      %925 = vmatprep.subr.mxu0 0.0
      %926 = vmatpush2.xpose.msra.mxu0 %v579
      %927 = vmatprep.subr.mxu0 0.0
      %928 = vmatpush2.xpose.msra.mxu0 %v576
      %929 = vmatprep.subr.mxu0 0.0
      %930 = vmatpush2.xpose.msra.mxu0 %v573
      %931 = vmatprep.subr.mxu0 0.0
      %932 = vmatpush2.xpose.msra.mxu0 %v570
      %933 = vmatprep.subr.mxu0 0.0
      %934 = vmatpush2.xpose.msra.mxu0 %v567
      %935 = vmatprep.subr.mxu0 0.0
      %936 = vmatpush2.xpose.msra.mxu0 %v564
      %937 = vmatprep.subr.mxu0 0.0
      %938 = vmatpush2.xpose.msra.mxu0 %v561
      %939 = vmatprep.subr.mxu0 0.0
      %940 = vmatpush2.xpose.msra.mxu0 %v558
      %941 = vmatprep.mubr.f32.mxu0 0.0
      %942 = vmatmul.mubr.f32.gmra.mxu0 %v402
      %v943 = vpop.f32.mrf.mxu0
      %v944 = vadd.f32 0.0, %v943
      %v945 = vpop.f32.mrf.mxu0
      %v946 = vadd.f32 0.0, %v945
      %947 = vmatprep.mubr.f32.mxu0 0.0
      %948 = vmatmul.mubr.f32.gmra.mxu0 %v405
      %v949 = vpop.f32.mrf.mxu0
      %v950 = vadd.f32 0.0, %v949
      %v951 = vpop.f32.mrf.mxu0
      %v952 = vadd.f32 0.0, %v951
      %953 = vmatprep.mubr.f32.mxu0 0.0
      %954 = vmatmul.mubr.f32.gmra.mxu0 %v408
      %v955 = vpop.f32.mrf.mxu0
      %v956 = vadd.f32 0.0, %v955
      %v957 = vpop.f32.mrf.mxu0
      %v958 = vadd.f32 0.0, %v957
      %959 = vmatprep.mubr.f32.mxu0 0.0
      %960 = vmatmul.mubr.f32.gmra.mxu0 %v411
      %v961 = vpop.f32.mrf.mxu0
      %v962 = vadd.f32 0.0, %v961
      %v963 = vpop.f32.mrf.mxu0
      %v964 = vadd.f32 0.0, %v963
      %965 = vdwg.mxu0
      %966 = vmatprep.subr.mxu0 0.0
      %967 = vmatpush1.xpose.msra.mxu0 %v651
      %968 = vmatprep.subr.mxu0 0.0
      %969 = vmatpush1.xpose.msra.mxu0 %v648
      %970 = vmatprep.subr.mxu0 0.0
      %971 = vmatpush1.xpose.msra.mxu0 %v645
      %972 = vmatprep.subr.mxu0 0.0
      %973 = vmatpush1.xpose.msra.mxu0 %v642
      %974 = vmatprep.subr.mxu0 0.0
      %975 = vmatpush1.xpose.msra.mxu0 %v639
      %976 = vmatprep.subr.mxu0 0.0
      %977 = vmatpush1.xpose.msra.mxu0 %v636
      %978 = vmatprep.subr.mxu0 0.0
      %979 = vmatpush1.xpose.msra.mxu0 %v633
      %980 = vmatprep.subr.mxu0 0.0
      %981 = vmatpush1.xpose.msra.mxu0 %v630
      %982 = vmatprep.subr.mxu0 0.0
      %983 = vmatpush1.xpose.msra.mxu0 %v627
      %984 = vmatprep.subr.mxu0 0.0
      %985 = vmatpush1.xpose.msra.mxu0 %v624
      %986 = vmatprep.subr.mxu0 0.0
      %987 = vmatpush1.xpose.msra.mxu0 %v621
      %988 = vmatprep.subr.mxu0 0.0
      %989 = vmatpush1.xpose.msra.mxu0 %v618
      %990 = vmatprep.subr.mxu0 0.0
      %991 = vmatpush1.xpose.msra.mxu0 %v615
      %992 = vmatprep.subr.mxu0 0.0
      %993 = vmatpush1.xpose.msra.mxu0 %v612
      %994 = vmatprep.subr.mxu0 0.0
      %995 = vmatpush1.xpose.msra.mxu0 %v609
      %996 = vmatprep.subr.mxu0 0.0
      %997 = vmatpush1.xpose.msra.mxu0 %v606
      %998 = vmatprep.subr.mxu0 0.0
      %999 = vmatpush2.xpose.msra.mxu0 %v699
      %1000 = vmatprep.subr.mxu0 0.0
      %1001 = vmatpush2.xpose.msra.mxu0 %v696
      %1002 = vmatprep.subr.mxu0 0.0
      %1003 = vmatpush2.xpose.msra.mxu0 %v693
      %1004 = vmatprep.subr.mxu0 0.0
      %1005 = vmatpush2.xpose.msra.mxu0 %v690
      %1006 = vmatprep.subr.mxu0 0.0
      %1007 = vmatpush2.xpose.msra.mxu0 %v687
      %1008 = vmatprep.subr.mxu0 0.0
      %1009 = vmatpush2.xpose.msra.mxu0 %v684
      %1010 = vmatprep.subr.mxu0 0.0
      %1011 = vmatpush2.xpose.msra.mxu0 %v681
      %1012 = vmatprep.subr.mxu0 0.0
      %1013 = vmatpush2.xpose.msra.mxu0 %v678
      %1014 = vmatprep.subr.mxu0 0.0
      %1015 = vmatpush2.xpose.msra.mxu0 %v675
      %1016 = vmatprep.subr.mxu0 0.0
      %1017 = vmatpush2.xpose.msra.mxu0 %v672
      %1018 = vmatprep.subr.mxu0 0.0
      %1019 = vmatpush2.xpose.msra.mxu0 %v669
      %1020 = vmatprep.subr.mxu0 0.0
      %1021 = vmatpush2.xpose.msra.mxu0 %v666
      %1022 = vmatprep.subr.mxu0 0.0
      %1023 = vmatpush2.xpose.msra.mxu0 %v663
      %1024 = vmatprep.subr.mxu0 0.0
      %1025 = vmatpush2.xpose.msra.mxu0 %v660
      %1026 = vmatprep.subr.mxu0 0.0
      %1027 = vmatpush2.xpose.msra.mxu0 %v657
      %1028 = vmatprep.subr.mxu0 0.0
      %1029 = vmatpush2.xpose.msra.mxu0 %v654
      %1030 = vmatprep.mubr.f32.mxu0 0.0
      %1031 = vmatmul.mubr.f32.gmra.mxu0 %v402
      %v1032 = vpop.f32.mrf.mxu0
      %v1033 = vadd.f32 0.0, %v1032
      %v1034 = vpop.f32.mrf.mxu0
      %v1035 = vadd.f32 0.0, %v1034
      %1036 = vmatprep.mubr.f32.mxu0 0.0
      %1037 = vmatmul.mubr.f32.gmra.mxu0 %v405
      %v1038 = vpop.f32.mrf.mxu0
      %v1039 = vadd.f32 0.0, %v1038
      %v1040 = vpop.f32.mrf.mxu0
      %v1041 = vadd.f32 0.0, %v1040
      %1042 = vmatprep.mubr.f32.mxu0 0.0
      %1043 = vmatmul.mubr.f32.gmra.mxu0 %v408
      %v1044 = vpop.f32.mrf.mxu0
      %v1045 = vadd.f32 0.0, %v1044
      %v1046 = vpop.f32.mrf.mxu0
      %v1047 = vadd.f32 0.0, %v1046
      %1048 = vmatprep.mubr.f32.mxu0 0.0
      %1049 = vmatmul.mubr.f32.gmra.mxu0 %v411
      %v1050 = vpop.f32.mrf.mxu0
      %v1051 = vadd.f32 0.0, %v1050
      %v1052 = vpop.f32.mrf.mxu0
      %v1053 = vadd.f32 0.0, %v1052
      %1054 = vdwg.mxu0
      %1055 = vmatprep.subr.mxu0 0.0
      %1056 = vmatpush1.xpose.msra.mxu0 %v747
      %1057 = vmatprep.subr.mxu0 0.0
      %1058 = vmatpush1.xpose.msra.mxu0 %v744
      %1059 = vmatprep.subr.mxu0 0.0
      %1060 = vmatpush1.xpose.msra.mxu0 %v741
      %1061 = vmatprep.subr.mxu0 0.0
      %1062 = vmatpush1.xpose.msra.mxu0 %v738
      %1063 = vmatprep.subr.mxu0 0.0
      %1064 = vmatpush1.xpose.msra.mxu0 %v735
      %1065 = vmatprep.subr.mxu0 0.0
      %1066 = vmatpush1.xpose.msra.mxu0 %v732
      %1067 = vmatprep.subr.mxu0 0.0
      %1068 = vmatpush1.xpose.msra.mxu0 %v729
      %1069 = vmatprep.subr.mxu0 0.0
      %1070 = vmatpush1.xpose.msra.mxu0 %v726
      %1071 = vmatprep.subr.mxu0 0.0
      %1072 = vmatpush1.xpose.msra.mxu0 %v723
      %1073 = vmatprep.subr.mxu0 0.0
      %1074 = vmatpush1.xpose.msra.mxu0 %v720
      %1075 = vmatprep.subr.mxu0 0.0
      %1076 = vmatpush1.xpose.msra.mxu0 %v717
      %1077 = vmatprep.subr.mxu0 0.0
      %1078 = vmatpush1.xpose.msra.mxu0 %v714
      %1079 = vmatprep.subr.mxu0 0.0
      %1080 = vmatpush1.xpose.msra.mxu0 %v711
      %1081 = vmatprep.subr.mxu0 0.0
      %1082 = vmatpush1.xpose.msra.mxu0 %v708
      %1083 = vmatprep.subr.mxu0 0.0
      %1084 = vmatpush1.xpose.msra.mxu0 %v705
      %1085 = vmatprep.subr.mxu0 0.0
      %1086 = vmatpush1.xpose.msra.mxu0 %v702
      %1087 = vmatprep.subr.mxu0 0.0
      %1088 = vmatpush2.xpose.msra.mxu0 0.0
      %1089 = vmatprep.subr.mxu0 0.0
      %1090 = vmatpush2.xpose.msra.mxu0 0.0
      %1091 = vmatprep.subr.mxu0 0.0
      %1092 = vmatpush2.xpose.msra.mxu0 0.0
      %1093 = vmatprep.subr.mxu0 0.0
      %1094 = vmatpush2.xpose.msra.mxu0 %v786
      %1095 = vmatprep.subr.mxu0 0.0
      %1096 = vmatpush2.xpose.msra.mxu0 %v783
      %1097 = vmatprep.subr.mxu0 0.0
      %1098 = vmatpush2.xpose.msra.mxu0 %v780
      %1099 = vmatprep.subr.mxu0 0.0
      %1100 = vmatpush2.xpose.msra.mxu0 %v777
      %1101 = vmatprep.subr.mxu0 0.0
      %1102 = vmatpush2.xpose.msra.mxu0 %v774
      %1103 = vmatprep.subr.mxu0 0.0
      %1104 = vmatpush2.xpose.msra.mxu0 %v771
      %1105 = vmatprep.subr.mxu0 0.0
      %1106 = vmatpush2.xpose.msra.mxu0 %v768
      %1107 = vmatprep.subr.mxu0 0.0
      %1108 = vmatpush2.xpose.msra.mxu0 %v765
      %1109 = vmatprep.subr.mxu0 0.0
      %1110 = vmatpush2.xpose.msra.mxu0 %v762
      %1111 = vmatprep.subr.mxu0 0.0
      %1112 = vmatpush2.xpose.msra.mxu0 %v759
      %1113 = vmatprep.subr.mxu0 0.0
      %1114 = vmatpush2.xpose.msra.mxu0 %v756
      %1115 = vmatprep.subr.mxu0 0.0
      %1116 = vmatpush2.xpose.msra.mxu0 %v753
      %1117 = vmatprep.subr.mxu0 0.0
      %1118 = vmatpush2.xpose.msra.mxu0 %v750
      %1119 = vmatprep.mubr.f32.mxu0 0.0
      %1120 = vmatmul.mubr.f32.gmra.mxu0 %v402
      %v1121 = vpop.f32.mrf.mxu0
      %v1122 = vadd.f32 0.0, %v1121
      %v1123 = vpop.f32.mrf.mxu0
      %v1124 = vadd.f32 0.0, %v1123
      %1125 = vmatprep.mubr.f32.mxu0 0.0
      %1126 = vmatmul.mubr.f32.gmra.mxu0 %v405
      %v1127 = vpop.f32.mrf.mxu0
      %v1128 = vadd.f32 0.0, %v1127
      %v1129 = vpop.f32.mrf.mxu0
      %v1130 = vadd.f32 0.0, %v1129
      %1131 = vmatprep.mubr.f32.mxu0 0.0
      %1132 = vmatmul.mubr.f32.gmra.mxu0 %v408
      %v1133 = vpop.f32.mrf.mxu0
      %v1134 = vadd.f32 0.0, %v1133
      %v1135 = vpop.f32.mrf.mxu0
      %v1136 = vadd.f32 0.0, %v1135
      %1137 = vmatprep.mubr.f32.mxu0 0.0
      %1138 = vmatmul.mubr.f32.gmra.mxu0 %v411
      %v1139 = vpop.f32.mrf.mxu0
      %v1140 = vadd.f32 0.0, %v1139
      %v1141 = vpop.f32.mrf.mxu0
      %v1142 = vadd.f32 0.0, %v1141
      %1143 = vdwg.mxu0
      %v1144 = vld [vmem:[%s3] sm:$0xff]
      %v1145 = vld [vmem:[%s3 + $0x8] sm:$0xff]
      %1147 = vset.pattern.permute.xlu0 0
      %1148 = vperm.xlu0 %1147, %v1144
      %v1149 = vpop.permute.xlu0 %1148
      %1152 = vset.pattern.permute.xlu0 0
      %1153 = vperm.xlu0 %1152, %v1145
      %v1154 = vpop.permute.xlu0 %1153
      %v1156 = vadd.f32 %v867, %v1149
      %v1157 = vadd.f32 %v869, %v1149
      %v1158 = vadd.f32 %v956, %v1149
      %v1159 = vadd.f32 %v958, %v1149
      %v1160 = vadd.f32 %v1045, %v1149
      %v1161 = vadd.f32 %v1047, %v1149
      %v1162 = vadd.f32 %v1134, %v1149
      %v1163 = vadd.f32 %v1136, %v1149
      %v1164 = vadd.f32 %v873, %v1154
      %v1165 = vadd.f32 %v875, %v1154
      %v1166 = vadd.f32 %v962, %v1154
      %v1167 = vadd.f32 %v964, %v1154
      %v1168 = vadd.f32 %v1051, %v1154
      %v1169 = vadd.f32 %v1053, %v1154
      %v1170 = vadd.f32 %v1140, %v1154
      %v1171 = vadd.f32 %v1142, %v1154
      %v1172 = vtanh.pop %v1156
      %v1173 = vtanh.pop %v1157
      %v1174 = vtanh.pop %v1158
      %v1175 = vtanh.pop %v1159
      %v1176 = vtanh.pop %v1160
      %v1177 = vtanh.pop %v1161
      %v1178 = vtanh.pop %v1162
      %v1179 = vtanh.pop %v1163
      %v1180 = vtanh.pop %v1164
      %v1181 = vtanh.pop %v1165
      %v1182 = vtanh.pop %v1166
      %v1183 = vtanh.pop %v1167
      %v1184 = vtanh.pop %v1168
      %v1185 = vtanh.pop %v1169
      %v1186 = vtanh.pop %v1170
      %v1187 = vtanh.pop %v1171
      %v1188 = vld [vmem:[%s4] sm:$0xff]
      %v1189 = vld [vmem:[%s4 + $0x8] sm:$0xff]
      %1191 = vset.pattern.permute.xlu0 0
      %1192 = vperm.xlu0 %1191, %v1188
      %v1193 = vpop.permute.xlu0 %1192
      %1196 = vset.pattern.permute.xlu0 0
      %1197 = vperm.xlu0 %1196, %v1189
      %v1198 = vpop.permute.xlu0 %1197
      %v1200 = vmul.f32 %v1172, %v1193
      %v1201 = vmul.f32 %v1173, %v1193
      %v1202 = vmul.f32 %v1174, %v1193
      %v1203 = vmul.f32 %v1175, %v1193
      %v1204 = vmul.f32 %v1176, %v1193
      %v1205 = vmul.f32 %v1177, %v1193
      %v1206 = vmul.f32 %v1178, %v1193
      %v1207 = vmul.f32 %v1179, %v1193
      %v1208 = vmul.f32 %v1180, %v1198
      %v1209 = vmul.f32 %v1181, %v1198
      %v1210 = vmul.f32 %v1182, %v1198
      %v1211 = vmul.f32 %v1183, %v1198
      %v1212 = vmul.f32 %v1184, %v1198
      %v1213 = vmul.f32 %v1185, %v1198
      %v1214 = vmul.f32 %v1186, %v1198
      %v1215 = vmul.f32 %v1187, %v1198
      %v1216 = vadd.f32 %v1200, %v1208
      %v1217 = vrot.slane %v1216, 4
      %v1218 = vadd.f32 %v1216, %v1217
      %v1219 = vrot.slane %v1218, 2
      %v1220 = vadd.f32 %v1218, %v1219
      %v1221 = vrot.slane %v1220, 1
      %v1222 = vadd.f32 %v1220, %v1221
      %v1223 = vadd.f32 %v1201, %v1209
      %v1224 = vrot.slane %v1223, 4
      %v1225 = vadd.f32 %v1223, %v1224
      %v1226 = vrot.slane %v1225, 2
      %v1227 = vadd.f32 %v1225, %v1226
      %v1228 = vrot.slane %v1227, 1
      %v1229 = vadd.f32 %v1227, %v1228
      %v1230 = vadd.f32 %v1202, %v1210
      %v1231 = vrot.slane %v1230, 4
      %v1232 = vadd.f32 %v1230, %v1231
      %v1233 = vrot.slane %v1232, 2
      %v1234 = vadd.f32 %v1232, %v1233
      %v1235 = vrot.slane %v1234, 1
      %v1236 = vadd.f32 %v1234, %v1235
      %v1237 = vadd.f32 %v1203, %v1211
      %v1238 = vrot.slane %v1237, 4
      %v1239 = vadd.f32 %v1237, %v1238
      %v1240 = vrot.slane %v1239, 2
      %v1241 = vadd.f32 %v1239, %v1240
      %v1242 = vrot.slane %v1241, 1
      %v1243 = vadd.f32 %v1241, %v1242
      %v1244 = vadd.f32 %v1204, %v1212
      %v1245 = vrot.slane %v1244, 4
      %v1246 = vadd.f32 %v1244, %v1245
      %v1247 = vrot.slane %v1246, 2
      %v1248 = vadd.f32 %v1246, %v1247
      %v1249 = vrot.slane %v1248, 1
      %v1250 = vadd.f32 %v1248, %v1249
      %v1251 = vadd.f32 %v1205, %v1213
      %v1252 = vrot.slane %v1251, 4
      %v1253 = vadd.f32 %v1251, %v1252
      %v1254 = vrot.slane %v1253, 2
      %v1255 = vadd.f32 %v1253, %v1254
      %v1256 = vrot.slane %v1255, 1
      %v1257 = vadd.f32 %v1255, %v1256
      %v1258 = vadd.f32 %v1206, %v1214
      %v1259 = vrot.slane %v1258, 4
      %v1260 = vadd.f32 %v1258, %v1259
      %v1261 = vrot.slane %v1260, 2
      %v1262 = vadd.f32 %v1260, %v1261
      %v1263 = vrot.slane %v1262, 1
      %v1264 = vadd.f32 %v1262, %v1263
      %vm1265 = vcmask 850944
      %v1266 = vsel %vm1265, %v1207, 0.0
      %v1267 = vsel %vm1265, %v1215, 0.0
      %v1268 = vadd.f32 %v1266, %v1267
      %v1269 = vrot.slane %v1268, 4
      %v1270 = vadd.f32 %v1268, %v1269
      %v1271 = vrot.slane %v1270, 2
      %v1272 = vadd.f32 %v1270, %v1271
      %v1273 = vrot.slane %v1272, 1
      %v1274 = vadd.f32 %v1272, %v1273
      %v1275 = vld [vmem:[#allocation5] sm:$0x1]
      %1277 = vset.pattern.permute.xlu0 0
      %1278 = vperm.xlu0 %1277, %v1275
      %v1279 = vpop.permute.xlu0 %1278
      %v1281 = vlaneseq
      %v1282 = vshrl.u32 %v1281, 7
      %v1283 = vsub.s32 0, %v1282
      %v1284 = vrot.slane %v1279, %v1283
      %v1285 = vadd.f32 %v1222, %v1284
      %v1286 = vadd.f32 %v1229, %v1284
      %v1287 = vadd.f32 %v1236, %v1284
      %v1288 = vadd.f32 %v1243, %v1284
      %v1289 = vadd.f32 %v1250, %v1284
      %v1290 = vadd.f32 %v1257, %v1284
      %v1291 = vadd.f32 %v1264, %v1284
      %v1292 = vadd.f32 %v1274, %v1284
      %s1293 = sadd.s32 %s24, %s25
      %s1294 = smul.u32 %s1293, 1000
      %v1295 = vlaneseq
      %v1296 = vand.u32 %v1295, 127
      %v1297 = vadd.s32 %v1296, 128
      %v1298 = vadd.s32 %v1296, 256
      %v1299 = vadd.s32 %v1296, 384
      %v1300 = vadd.s32 %v1296, 512
      %v1301 = vadd.s32 %v1296, 640
      %v1302 = vadd.s32 %v1296, 768
      %v1303 = vadd.s32 %v1296, 896
      %v1304 = vstv %s1294
      %v1305 = vadd.s32 %v1296, %v1304
      %v1306 = vadd.s32 %v1297, %v1304
      %v1307 = vadd.s32 %v1298, %v1304
      %v1308 = vadd.s32 %v1299, %v1304
      %v1309 = vadd.s32 %v1300, %v1304
      %v1310 = vadd.s32 %v1301, %v1304
      %v1311 = vadd.s32 %v1302, %v1304
      %v1312 = vadd.s32 %v1303, %v1304
      %s1313 = sld [smem:[#allocation4]]
      %v1314 = vstv %s1313
      %vm1315 = vcmp.lt.s32.totalorder %v1305, %v1314
      %vm1316 = vcmp.lt.s32.totalorder %v1306, %v1314
      %vm1317 = vcmp.lt.s32.totalorder %v1307, %v1314
      %vm1318 = vcmp.lt.s32.totalorder %v1308, %v1314
      %vm1319 = vcmp.lt.s32.totalorder %v1309, %v1314
      %vm1320 = vcmp.lt.s32.totalorder %v1310, %v1314
      %vm1321 = vcmp.lt.s32.totalorder %v1311, %v1314
      %vm1322 = vcmp.lt.s32.totalorder %v1312, %v1314
      %v1323 = vsel %vm1315, %v1285, 0.0
      %v1324 = vsel %vm1316, %v1286, 0.0
      %v1325 = vsel %vm1317, %v1287, 0.0
      %v1326 = vsel %vm1318, %v1288, 0.0
      %v1327 = vsel %vm1319, %v1289, 0.0
      %v1328 = vsel %vm1320, %v1290, 0.0
      %v1329 = vsel %vm1321, %v1291, 0.0
      %v1330 = vsel %vm1322, %v1292, 0.0
      %v1331 = vsel %vm1315, 1, 0
      %v1332 = vsel %vm1316, 1, 0
      %v1333 = vsel %vm1317, 1, 0
      %v1334 = vsel %vm1318, 1, 0
      %v1335 = vsel %vm1319, 1, 0
      %v1336 = vsel %vm1320, 1, 0
      %v1337 = vsel %vm1321, 1, 0
      %v1338 = vsel %vm1322, 1, 0
      %vm1339 = vcmp.eq.s32.totalorder %v1331, 1
      %vm1340 = vcmp.eq.s32.totalorder %v1332, 1
      %vm1341 = vcmp.eq.s32.totalorder %v1333, 1
      %vm1342 = vcmp.eq.s32.totalorder %v1334, 1
      %vm1343 = vcmp.eq.s32.totalorder %v1335, 1
      %vm1344 = vcmp.eq.s32.totalorder %v1336, 1
      %vm1345 = vcmp.eq.s32.totalorder %v1337, 1
      %vm1346 = vcmp.eq.s32.totalorder %v1338, 1
      %v1347 = vsel %vm1339, %v855, 0.0
      %v1348 = vsel %vm1340, %v857, 0.0
      %v1349 = vsel %vm1341, %v944, 0.0
      %v1350 = vsel %vm1342, %v946, 0.0
      %v1351 = vsel %vm1343, %v1033, 0.0
      %v1352 = vsel %vm1344, %v1035, 0.0
      %v1353 = vsel %vm1345, %v1122, 0.0
      %v1354 = vsel %vm1346, %v1124, 0.0
      %v1355 = vsel %vm1339, %v861, 0.0
      %v1356 = vsel %vm1340, %v863, 0.0
      %v1357 = vsel %vm1341, %v950, 0.0
      %v1358 = vsel %vm1342, %v952, 0.0
      %v1359 = vsel %vm1343, %v1039, 0.0
      %v1360 = vsel %vm1344, %v1041, 0.0
      %v1361 = vsel %vm1345, %v1128, 0.0
      %v1362 = vsel %vm1346, %v1130, 0.0
      %v1363 = vld [vmem:[#allocation2] sm:$0xff]
      %v1364 = vld [vmem:[#allocation2 + $0x8] sm:$0xff]
      %v1365 = vmul.f32 %v1347, %v1323
      %v1366 = vmul.f32 %v1348, %v1324
      %v1367 = vmul.f32 %v1349, %v1325
      %v1368 = vmul.f32 %v1350, %v1326
      %v1369 = vmul.f32 %v1351, %v1327
      %v1370 = vmul.f32 %v1352, %v1328
      %v1371 = vmul.f32 %v1353, %v1329
      %v1372 = vmul.f32 %v1354, %v1330
      %v1373 = vmul.f32 %v1355, %v1323
      %v1374 = vmul.f32 %v1356, %v1324
      %v1375 = vmul.f32 %v1357, %v1325
      %v1376 = vmul.f32 %v1358, %v1326
      %v1377 = vmul.f32 %v1359, %v1327
      %v1378 = vmul.f32 %v1360, %v1328
      %v1379 = vmul.f32 %v1361, %v1329
      %v1380 = vmul.f32 %v1362, %v1330
      %v1381 = vadd.f32 %v1365, %v1366
      %v1382 = vadd.f32 %v1381, %v1367
      %v1383 = vadd.f32 %v1382, %v1368
      %v1384 = vadd.f32 %v1383, %v1369
      %v1385 = vadd.f32 %v1384, %v1370
      %v1386 = vadd.f32 %v1385, %v1371
      %v1387 = vsel %vm1265, %v1372, 0.0
      %v1388 = vadd.f32 %v1386, %v1387
      %1389 = vadd.xlane.f32.xlu0 %v1388
      %v1390 = vpop.xlane.xlu0 %1389
      %v1391 = vadd.f32 %v1373, %v1374
      %v1392 = vadd.f32 %v1391, %v1375
      %v1393 = vadd.f32 %v1392, %v1376
      %v1394 = vadd.f32 %v1393, %v1377
      %v1395 = vadd.f32 %v1394, %v1378
      %v1396 = vadd.f32 %v1395, %v1379
      %v1397 = vsel %vm1265, %v1380, 0.0
      %v1398 = vadd.f32 %v1396, %v1397
      %1399 = vadd.xlane.f32.xlu0 %v1398
      %v1400 = vpop.xlane.xlu0 %1399
      %v1401 = vadd.f32 %v1363, %v1390
      %v1402 = vadd.f32 %v1364, %v1400
      %vm1403 = vcmask 7168
      %1404 = vst.msk [vmem:[#allocation2] sm:$0xff] %vm1403, %v1401
      %1405 = vst.msk [vmem:[#allocation2 + $0x8] sm:$0xff] %vm1403, %v1402
      // Predicated region
      $region45: #{tpu_custom_call.1} parent=39 // pred_check
        %p1406 = pneg %p264
      $region46: #{tpu_custom_call.1} parent=39 // pred_check_branch
        %1408 = sbr.rel (%p1406) target = $region48
      $region47: #{tpu_custom_call.1} parent=39 // pred_region
        %s1409 = sld [smem:[#allocation4]]
        %s1410 = scvt.s32.f32 %s1409
        %v1411 = vstv %s1410
        %v1412 = vrcp.pop %v1411
        %s1413 = vtos %v1412
        %v1414 = vld [vmem:[#allocation2] sm:$0xff]
        %v1415 = vld [vmem:[#allocation2 + $0x8] sm:$0xff]
        %v1416 = vstv %s1413
        %v1417 = vmul.f32 %v1414, %v1416
        %v1418 = vmul.f32 %v1415, %v1416
        %1419 = vst.msk [vmem:[%s263] sm:$0xff] %vm1403, %v1417
        %1420 = vst.msk [vmem:[%s263 + $0x8] sm:$0xff] %vm1403, %v1418
      $region48: #{tpu_custom_call.1} parent=39 // pred_fallthru
        _
      %p1421 = scmp.lt.s32.totalorder %s24, 1
      %s1422 = scalar_select %p1421, %s24, 1
      %s1423 = smul.addr %s1422, 2
      %s1424 = smul.addr %s1423, 8
      %s1425 = scalar_lea.vmem %s6, %s1424
      // Predicated region
      $region49: #{tpu_custom_call.1} parent=39 // pred_check
        %p1426 = pneg %p166
      $region50: #{tpu_custom_call.1} parent=39 // pred_check_branch
        %1428 = sbr.rel (%p1426) target = $region52
      $region51: #{tpu_custom_call.1} parent=39 // pred_region
        _
      $region52: #{tpu_custom_call.1} parent=39 // pred_fallthru
        _
    $region40: #{tpu_custom_call.1} parent=5 // pred_fallthru
      _
    %p1429 = scmp.le.s32.totalorder 2, %s15
    // Predicated region
    $region53: #{tpu_custom_call.1} parent=5 // pred_check
      %p1430 = pneg %p1429
    $region54: #{tpu_custom_call.1} parent=5 // pred_check_branch
      %1432 = sbr.rel (%p1430) target = $region56
    $region55: #{tpu_custom_call.1} parent=5 // pred_region
      %s1433 = ssub.s32 %s15, 2
      // Predicated region
      $region57: #{tpu_custom_call.1} parent=55 // pred_check
        %p1434 = pneg %p172
      $region58: #{tpu_custom_call.1} parent=55 // pred_check_branch
        %1436 = sbr.rel (%p1434) target = $region60
      $region59: #{tpu_custom_call.1} parent=55 // pred_region
        %p1437 = scmp.lt.s32.totalorder %s26, 1
        %s1438 = scalar_select %p1437, %s26, 1
        %s1439 = smul.addr %s1438, 2
        %s1440 = smul.addr %s1439, 8
        %s1441 = scalar_lea.vmem %s6, %s1440
      $region60: #{tpu_custom_call.1} parent=55 // pred_fallthru
        _
    $region56: #{tpu_custom_call.1} parent=5 // pred_fallthru
      _
  $region6: #{tpu_custom_call.1} parent=0 // loop_footer
    %s19 = sadd.s32 1, %s15
  $region7: #{tpu_custom_call.1} parent=0 // loop_footer_branch
    %14 = sbr.rel target = $region3
  $region8: #{tpu_custom_call.1} parent=0 // loop_exit
    _

</llo_original>
